<compile_context>
chip_gen: v6e
topology: v6e:2x2x1
jax: 0.10.0
libtpu: 0.0.40
codegen_flags: <defaults>
</compile_context>

<pallas_src>
import functools

import jax
import jax.numpy as jnp
from jax.experimental import pallas as pl
from jax.experimental.pallas import tpu as pltpu


def _tversky_kernel(logits_ref, labels_ref, out_ref,
                    tps_acc, sp_acc, st_acc, *, alpha, beta, eps):
    # logits_ref: (1, C, T) float     labels_ref: (1, 1, T) int32
    # out_ref:    (1, 1, 128) f32     scratch:    (1, C, 1) f32 each
    hw = pl.program_id(1)

    @pl.when(hw == 0)
    def _():
        tps_acc[...] = jnp.zeros_like(tps_acc)
        sp_acc[...] = jnp.zeros_like(sp_acc)
        st_acc[...] = jnp.zeros_like(st_acc)

    x = logits_ref[...]
    if x.dtype != jnp.float32:          # cast after DMA (VPU), not in HBM
        x = x.astype(jnp.float32)
    lab = labels_ref[...]               # (1, 1, T) int32
    _, C, T = x.shape

    # softmax over channels (dim=1 of NCHW): per-pixel, local to this HW tile
    m = jnp.max(x, axis=1, keepdims=True)                    # (1, 1, T)
    e = jnp.exp(x - m)                                       # (1, C, T)
    z = jnp.sum(e, axis=1, keepdims=True)                    # (1, 1, T)
    w = pl.reciprocal(z, approx=True)                        # EUP slot
    w = w * (2.0 - z * w)                                    # one Newton step
    p = e * w                                                # (1, C, T)

    # fused one-hot mask (no materialized f32 one-hot tensor)
    ch = jax.lax.broadcasted_iota(jnp.int32, (1, C, T), 1)
    mask = ch == lab                                         # (1, C, T) bool

    # spatial (lane-axis) partial reductions, accumulated across HW tiles
    tps_acc[...] += jnp.sum(jnp.where(mask, p, 0.0), axis=2, keepdims=True)
    sp_acc[...] += jnp.sum(p, axis=2, keepdims=True)
    st_acc[...] += jnp.sum(jnp.where(mask, 1.0, 0.0), axis=2, keepdims=True)

    @pl.when(hw == pl.num_programs(1) - 1)
    def _():
        tps = tps_acc[...]                                   # (1, C, 1)
        # algebraic identities: fps = a*(sum_p - tps), fns = b*(sum_t - tps)
        fps = alpha * (sp_acc[...] - tps)
        fns = beta * (st_acc[...] - tps)
        two_tps = 2.0 * tps
        ratio = two_tps * pl.reciprocal(two_tps + fps + fns + eps, approx=False)
        # foreground sum = total - background class 0 (no iota / mask pass)
        s_all = jnp.sum(ratio, axis=1, keepdims=True)        # (1, 1, 1)
        s_fg = s_all - ratio[:, 0:1, :]                      # (1, 1, 1)
        out_ref[...] = jnp.broadcast_to(s_fg, (1, 1, 128))


def _pick_hw_tile(HW, C, logits_itemsize, budget_bytes=8 << 20):
    """Largest HW tile (multiple of 128 dividing HW) whose double-buffered
    logits + sublane-padded int32 labels footprint stays under budget."""
    if HW % 128 != 0:
        return HW  # irregular / toy spatial size: single tile
    per_lane = 2 * (C * logits_itemsize + 8 * 4)   # 2x-buffered logits + padded labels
    max_lanes = max(128, (budget_bytes // per_lane) // 128 * 128)
    units = HW // 128
    best = 1
    for d in range(1, units + 1):
        if units % d == 0 and d * 128 <= max_lanes:
            best = d
    return best * 128


def tversky_loss(logits, labels, *, alpha, eps=1e-5, hw_tile=None):
    """Pallas implementation of tversky_loss.forward(inputs, targets)."""
    N, C, H, W = logits.shape
    HW = H * W
    beta = 2.0 - alpha

    # contiguous reshapes only (free); no dtype change of logits in HBM
    x = logits.reshape(N, C, HW)
    lab = labels.astype(jnp.int32).reshape(N, 1, HW)

    if hw_tile is None:
        hw_tile = _pick_hw_tile(HW, C, x.dtype.itemsize)
    assert HW % hw_tile == 0, (HW, hw_tile)
    num_hw = HW // hw_tile

    kernel = functools.partial(
        _tversky_kernel, alpha=float(alpha), beta=float(beta), eps=float(eps))

    fg_rows = pl.pallas_call(
        kernel,
        out_shape=jax.ShapeDtypeStruct((N, 1, 128), jnp.float32),
        grid_spec=pltpu.PrefetchScalarGridSpec(
            num_scalar_prefetch=0,
            grid=(N, num_hw),                     # reduction axis (HW) last
            in_specs=[
                pl.BlockSpec((1, C, hw_tile), lambda n, h: (n, 0, h)),
                pl.BlockSpec((1, 1, hw_tile), lambda n, h: (n, 0, h)),
            ],
            out_specs=pl.BlockSpec((1, 1, 128), lambda n, h: (n, 0, 0)),
            scratch_shapes=[pltpu.VMEM((1, C, 1), jnp.float32)] * 3,
        ),
        compiler_params=pltpu.CompilerParams(
            dimension_semantics=("parallel", "arbitrary")),  # batch uses both TCs on v7x
    )(x, lab)

    # tiny scalar epilogue: mean over batch, drop class 0, mean over fg classes
    return 1.0 - jnp.sum(fg_rows[:, 0, 0]) / (N * (C - 1))


def _reference_loss(logits, labels, *, alpha, eps=1e-5):
    """Pure-JAX replica of the PyTorch forward, for verification."""
    C = logits.shape[1]
    t = jax.nn.one_hot(labels, C, axis=1, dtype=jnp.float32)
    p = jax.nn.softmax(logits.astype(jnp.float32), axis=1)
    dims = (2, 3)
    tps = jnp.sum(p * t, dims)
    fps = jnp.sum(p * (1.0 - t), dims) * alpha
    fns = jnp.sum((1.0 - p) * t, dims) * (2.0 - alpha)
    loss = 2.0 * tps / (2.0 * tps + fps + fns + eps)
    loss = jnp.mean(loss, axis=0)
    return 1.0 - jnp.mean(loss[1:])


if __name__ == "__main__":
    # deterministic "parameters" of the module
    alpha = 1.3           # beta = 2 - alpha = 0.7
    eps = 1e-5

    key = jax.random.PRNGKey(0)
    k_logits, k_labels = jax.random.split(key)

    N, C, H, W = 2, 4, 16, 16
    logits = jax.random.normal(k_logits, (N, C, H, W), dtype=jnp.float32)
    labels = jax.random.randint(k_labels, (N, H, W), 0, C, dtype=jnp.int32)

    # hw_tile=128 forces 2 HW grid steps so the accumulate path is exercised
    out = tversky_loss(logits, labels, alpha=alpha, eps=eps, hw_tile=128)
    out = jax.block_until_ready(out)

    ref = _reference_loss(logits, labels, alpha=alpha, eps=eps)
    assert jnp.allclose(out, ref, atol=1e-5, rtol=1e-5), (out, ref)

    print("KERNEL_OK")
</pallas_src>

<mosaic_0001>
module attributes {stable_mosaic.version = 11 : i64} {
  func.func @_tversky_kernel(%arg0: i32, %arg1: i32, %arg2: memref<1x4x128xf32, #tpu.memory_space<vmem>>, %arg3: memref<1x1x128xi32, #tpu.memory_space<vmem>>, %arg4: memref<1x1x128xf32, #tpu.memory_space<vmem>>, %arg5: memref<1x4x1xf32, #tpu.memory_space<vmem>>, %arg6: memref<1x4x1xf32, #tpu.memory_space<vmem>>, %arg7: memref<1x4x1xf32, #tpu.memory_space<vmem>>) attributes {dimension_semantics = [#tpu.dimension_semantics<parallel>, #tpu.dimension_semantics<arbitrary>], iteration_bounds = array<i64: 2, 2>, scalar_prefetch = 0 : i64, scratch_operands = 3 : i64, tpu.core_type = #tpu.core_type<tc>, window_params = [{transform_indices = @transform_0, window_bounds = array<i64: 1, 4, 128>}, {transform_indices = @transform_1, window_bounds = array<i64: 1, 1, 128>}, {transform_indices = @transform_2, window_bounds = array<i64: 1, 1, 128>}]} {
    %c0_i32 = arith.constant 0 : i32
    %0 = arith.cmpi eq, %arg1, %c0_i32 : i32
    %1 = arith.extui %0 : i1 to i32
    %c0_i32_0 = arith.constant 0 : i32
    %2 = arith.cmpi ne, %1, %c0_i32_0 : i32
    scf.if %2 {
      %cst_33 = arith.constant 0.000000e+00 : f32
      %45 = vector.broadcast %cst_33 : f32 to vector<1x4x1xf32>
      %c0_34 = arith.constant 0 : index
      %c0_35 = arith.constant 0 : index
      %c0_36 = arith.constant 0 : index
      %46 = vector.load %arg5[%c0_34, %c0_35, %c0_36] : memref<1x4x1xf32, #tpu.memory_space<vmem>>, vector<1x4x1xf32>
      tpu.vector_store %arg5[%c0_34, %c0_35, %c0_36], %45 {strides = array<i32>} : memref<1x4x1xf32, #tpu.memory_space<vmem>>, vector<1x4x1xf32>,
      %cst_37 = arith.constant 0.000000e+00 : f32
      %47 = vector.broadcast %cst_37 : f32 to vector<1x4x1xf32>
      %c0_38 = arith.constant 0 : index
      %c0_39 = arith.constant 0 : index
      %c0_40 = arith.constant 0 : index
      %48 = vector.load %arg6[%c0_38, %c0_39, %c0_40] : memref<1x4x1xf32, #tpu.memory_space<vmem>>, vector<1x4x1xf32>
      tpu.vector_store %arg6[%c0_38, %c0_39, %c0_40], %47 {strides = array<i32>} : memref<1x4x1xf32, #tpu.memory_space<vmem>>, vector<1x4x1xf32>,
      %cst_41 = arith.constant 0.000000e+00 : f32
      %49 = vector.broadcast %cst_41 : f32 to vector<1x4x1xf32>
      %c0_42 = arith.constant 0 : index
      %c0_43 = arith.constant 0 : index
      %c0_44 = arith.constant 0 : index
      %50 = vector.load %arg7[%c0_42, %c0_43, %c0_44] : memref<1x4x1xf32, #tpu.memory_space<vmem>>, vector<1x4x1xf32>
      tpu.vector_store %arg7[%c0_42, %c0_43, %c0_44], %49 {strides = array<i32>} : memref<1x4x1xf32, #tpu.memory_space<vmem>>, vector<1x4x1xf32>,
    } else {
    }
    %c0 = arith.constant 0 : index
    %c0_1 = arith.constant 0 : index
    %c0_2 = arith.constant 0 : index
    %3 = vector.load %arg2[%c0, %c0_1, %c0_2] : memref<1x4x128xf32, #tpu.memory_space<vmem>>, vector<1x4x128xf32>
    %c0_3 = arith.constant 0 : index
    %c0_4 = arith.constant 0 : index
    %c0_5 = arith.constant 0 : index
    %4 = vector.load %arg3[%c0_3, %c0_4, %c0_5] : memref<1x1x128xi32, #tpu.memory_space<vmem>>, vector<1x1x128xi32>
    %cst = arith.constant dense<0xFF800000> : vector<1x128xf32>
    %5 = vector.multi_reduction <maximumf>, %3, %cst [1] : vector<1x4x128xf32> to vector<1x128xf32>
    %6 = vector.shape_cast %5 : vector<1x128xf32> to vector<1x1x128xf32>
    %7 = vector.broadcast %6 : vector<1x1x128xf32> to vector<1x4x128xf32>
    %8 = arith.subf %3, %7 : vector<1x4x128xf32>
    %9 = math.exp %8 : vector<1x4x128xf32>
    %cst_6 = arith.constant dense<0.000000e+00> : vector<1x128xf32>
    %10 = vector.multi_reduction <add>, %9, %cst_6 [1] : vector<1x4x128xf32> to vector<1x128xf32>
    %11 = vector.shape_cast %10 : vector<1x128xf32> to vector<1x1x128xf32>
    %12 = tpu.reciprocal %11 {approx = true} : vector<1x1x128xf32> -> vector<1x1x128xf32>
    %13 = arith.mulf %11, %12 : vector<1x1x128xf32>
    %cst_7 = arith.constant 2.000000e+00 : f32
    %14 = vector.broadcast %cst_7 : f32 to vector<1x1x128xf32>
    %15 = arith.subf %14, %13 : vector<1x1x128xf32>
    %16 = arith.mulf %12, %15 : vector<1x1x128xf32>
    %17 = vector.broadcast %16 : vector<1x1x128xf32> to vector<1x4x128xf32>
    %18 = arith.mulf %9, %17 : vector<1x4x128xf32>
    %19 = tpu.iota {dimensions = array<i32: 1>} : vector<1x4x128xi32>
    %20 = vector.broadcast %4 : vector<1x1x128xi32> to vector<1x4x128xi32>
    %21 = arith.cmpi eq, %19, %20 : vector<1x4x128xi32>
    %c0_8 = arith.constant 0 : index
    %c0_9 = arith.constant 0 : index
    %c0_10 = arith.constant 0 : index
    %22 = vector.load %arg5[%c0_8, %c0_9, %c0_10] : memref<1x4x1xf32, #tpu.memory_space<vmem>>, vector<1x4x1xf32>
    %cst_11 = arith.constant 0.000000e+00 : f32
    %23 = vector.broadcast %cst_11 : f32 to vector<1x4x128xf32>
    %24 = arith.select %21, %18, %23 : vector<1x4x128xi1>, vector<1x4x128xf32>
    %cst_12 = arith.constant dense<0.000000e+00> : vector<1x4xf32>
    %25 = vector.multi_reduction <add>, %24, %cst_12 [2] : vector<1x4x128xf32> to vector<1x4xf32>
    %26 = vector.shape_cast %25 : vector<1x4xf32> to vector<1x4x1xf32>
    %27 = arith.addf %22, %26 : vector<1x4x1xf32>
    %c0_13 = arith.constant 0 : index
    %c0_14 = arith.constant 0 : index
    %c0_15 = arith.constant 0 : index
    %28 = vector.load %arg5[%c0_13, %c0_14, %c0_15] : memref<1x4x1xf32, #tpu.memory_space<vmem>>, vector<1x4x1xf32>
    tpu.vector_store %arg5[%c0_13, %c0_14, %c0_15], %27 {strides = array<i32>} : memref<1x4x1xf32, #tpu.memory_space<vmem>>, vector<1x4x1xf32>,
    %c0_16 = arith.constant 0 : index
    %c0_17 = arith.constant 0 : index
    %c0_18 = arith.constant 0 : index
    %29 = vector.load %arg6[%c0_16, %c0_17, %c0_18] : memref<1x4x1xf32, #tpu.memory_space<vmem>>, vector<1x4x1xf32>
    %cst_19 = arith.constant dense<0.000000e+00> : vector<1x4xf32>
    %30 = vector.multi_reduction <add>, %18, %cst_19 [2] : vector<1x4x128xf32> to vector<1x4xf32>
    %31 = vector.shape_cast %30 : vector<1x4xf32> to vector<1x4x1xf32>
    %32 = arith.addf %29, %31 : vector<1x4x1xf32>
    %c0_20 = arith.constant 0 : index
    %c0_21 = arith.constant 0 : index
    %c0_22 = arith.constant 0 : index
    %33 = vector.load %arg6[%c0_20, %c0_21, %c0_22] : memref<1x4x1xf32, #tpu.memory_space<vmem>>, vector<1x4x1xf32>
    tpu.vector_store %arg6[%c0_20, %c0_21, %c0_22], %32 {strides = array<i32>} : memref<1x4x1xf32, #tpu.memory_space<vmem>>, vector<1x4x1xf32>,
    %c0_23 = arith.constant 0 : index
    %c0_24 = arith.constant 0 : index
    %c0_25 = arith.constant 0 : index
    %34 = vector.load %arg7[%c0_23, %c0_24, %c0_25] : memref<1x4x1xf32, #tpu.memory_space<vmem>>, vector<1x4x1xf32>
    %cst_26 = arith.constant 1.000000e+00 : f32
    %cst_27 = arith.constant 0.000000e+00 : f32
    %35 = vector.broadcast %cst_26 : f32 to vector<1x4x128xf32>
    %36 = vector.broadcast %cst_27 : f32 to vector<1x4x128xf32>
    %37 = arith.select %21, %35, %36 : vector<1x4x128xi1>, vector<1x4x128xf32>
    %cst_28 = arith.constant dense<0.000000e+00> : vector<1x4xf32>
    %38 = vector.multi_reduction <add>, %37, %cst_28 [2] : vector<1x4x128xf32> to vector<1x4xf32>
    %39 = vector.shape_cast %38 : vector<1x4xf32> to vector<1x4x1xf32>
    %40 = arith.addf %34, %39 : vector<1x4x1xf32>
    %c0_29 = arith.constant 0 : index
    %c0_30 = arith.constant 0 : index
    %c0_31 = arith.constant 0 : index
    %41 = vector.load %arg7[%c0_29, %c0_30, %c0_31] : memref<1x4x1xf32, #tpu.memory_space<vmem>>, vector<1x4x1xf32>
    tpu.vector_store %arg7[%c0_29, %c0_30, %c0_31], %40 {strides = array<i32>} : memref<1x4x1xf32, #tpu.memory_space<vmem>>, vector<1x4x1xf32>,
    %c1_i32 = arith.constant 1 : i32
    %42 = arith.cmpi eq, %arg1, %c1_i32 : i32
    %43 = arith.extui %42 : i1 to i32
    %c0_i32_32 = arith.constant 0 : i32
    %44 = arith.cmpi ne, %43, %c0_i32_32 : i32
    scf.if %44 {
      %c0_33 = arith.constant 0 : index
      %c0_34 = arith.constant 0 : index
      %c0_35 = arith.constant 0 : index
      %45 = vector.load %arg5[%c0_33, %c0_34, %c0_35] : memref<1x4x1xf32, #tpu.memory_space<vmem>>, vector<1x4x1xf32>
      %c0_36 = arith.constant 0 : index
      %c0_37 = arith.constant 0 : index
      %c0_38 = arith.constant 0 : index
      %46 = vector.load %arg6[%c0_36, %c0_37, %c0_38] : memref<1x4x1xf32, #tpu.memory_space<vmem>>, vector<1x4x1xf32>
      %47 = arith.subf %46, %45 : vector<1x4x1xf32>
      %cst_39 = arith.constant 1.300000e+00 : f32
      %48 = vector.broadcast %cst_39 : f32 to vector<1x4x1xf32>
      %49 = arith.mulf %48, %47 : vector<1x4x1xf32>
      %c0_40 = arith.constant 0 : index
      %c0_41 = arith.constant 0 : index
      %c0_42 = arith.constant 0 : index
      %50 = vector.load %arg7[%c0_40, %c0_41, %c0_42] : memref<1x4x1xf32, #tpu.memory_space<vmem>>, vector<1x4x1xf32>
      %51 = arith.subf %50, %45 : vector<1x4x1xf32>
      %cst_43 = arith.constant 0.699999988 : f32
      %52 = vector.broadcast %cst_43 : f32 to vector<1x4x1xf32>
      %53 = arith.mulf %52, %51 : vector<1x4x1xf32>
      %cst_44 = arith.constant 2.000000e+00 : f32
      %54 = vector.broadcast %cst_44 : f32 to vector<1x4x1xf32>
      %55 = arith.mulf %54, %45 : vector<1x4x1xf32>
      %56 = arith.addf %55, %49 : vector<1x4x1xf32>
      %57 = arith.addf %56, %53 : vector<1x4x1xf32>
      %cst_45 = arith.constant 9.99999974E-6 : f32
      %58 = vector.broadcast %cst_45 : f32 to vector<1x4x1xf32>
      %59 = arith.addf %57, %58 : vector<1x4x1xf32>
      %60 = tpu.reciprocal %59 : vector<1x4x1xf32> -> vector<1x4x1xf32>
      %61 = arith.mulf %55, %60 : vector<1x4x1xf32>
      %cst_46 = arith.constant dense<0.000000e+00> : vector<1x1xf32>
      %62 = vector.multi_reduction <add>, %61, %cst_46 [1] : vector<1x4x1xf32> to vector<1x1xf32>
      %63 = vector.shape_cast %62 : vector<1x1xf32> to vector<1x1x1xf32>
      %64 = vector.extract_strided_slice %61 {offsets = [0, 0, 0], sizes = [1, 1, 1], strides = [1, 1, 1]} : vector<1x4x1xf32> to vector<1x1x1xf32>
      %65 = arith.subf %63, %64 : vector<1x1x1xf32>
      %66 = vector.shape_cast %65 : vector<1x1x1xf32> to vector<1x1x1xf32>
      %67 = vector.broadcast %66 : vector<1x1x1xf32> to vector<1x1x128xf32>
      %c0_47 = arith.constant 0 : index
      %c0_48 = arith.constant 0 : index
      %c0_49 = arith.constant 0 : index
      %68 = vector.load %arg4[%c0_47, %c0_48, %c0_49] : memref<1x1x128xf32, #tpu.memory_space<vmem>>, vector<1x1x128xf32>
      tpu.vector_store %arg4[%c0_47, %c0_48, %c0_49], %67 {strides = array<i32>} : memref<1x1x128xf32, #tpu.memory_space<vmem>>, vector<1x1x128xf32>,
    } else {
    }
    return
  }
  func.func @transform_0(%arg0: i32, %arg1: i32) -> (i32, i32, i32) {
    %c0_i32 = arith.constant 0 : i32
    %c0_i32_0 = arith.constant 0 : i32
    return %arg0, %c0_i32, %arg1 : i32, i32, i32
  }
  func.func @transform_1(%arg0: i32, %arg1: i32) -> (i32, i32, i32) {
    %c0_i32 = arith.constant 0 : i32
    %c0_i32_0 = arith.constant 0 : i32
    return %arg0, %c0_i32, %arg1 : i32, i32, i32
  }
  func.func @transform_2(%arg0: i32, %arg1: i32) -> (i32, i32, i32) {
    %c0_i32 = arith.constant 0 : i32
    %c0_i32_0 = arith.constant 0 : i32
    %c0_i32_1 = arith.constant 0 : i32
    return %arg0, %c0_i32, %c0_i32_0 : i32, i32, i32
  }
}

</mosaic_0001>

<llo_original>
// kernel: tpu_custom_call.1
$region0: #{tpu_custom_call.1}
  #allocation0 [shape = 'u32[]', space=smem, size = 0x4, offset = 0x4, fixed_abs, tag = 'smem constant byte address 0x4 - core index']
  #allocation1 [shape = 'u32[144,128]{1,0:T(1,128)}', space=vmem, size = 0x12000, scoped, tag = 'internal scratch']
  #allocation2 [shape = 'f32[1,4,1]{2,1,0:T(4,128)}', space=vmem, size = 0x800, scoped, tag = 'scratch operand']
  #allocation3 [shape = 'f32[1,4,1]{2,1,0:T(4,128)}', space=vmem, size = 0x800, scoped, tag = 'scratch operand']
  #allocation4 [shape = 'f32[1,4,1]{2,1,0:T(4,128)}', space=vmem, size = 0x800, scoped, tag = 'scratch operand']
  %s0 = inlined_call_operand.hbm [shape: f32[2,4,256], index: 0, kind: input, shape index: {}]
  %s1 = inlined_call_operand.hbm [shape: s32[2,1,256], index: 1, kind: input, shape index: {}]
  %s2 = inlined_call_operand.hbm [shape: f32[2,1,128], index: 2, kind: output, shape index: {}]
  %s3 = sld [smem:[#allocation0]]
  $region57: #{tpu_custom_call.1} parent=0
    _
  %s5 = ssub.s32 1, %s3
  %s6 = scalar_select 0, %s5, %s3
  $region1: #{tpu_custom_call.1} parent=0
    #allocation5 [shape = 'u8[4096]{0}', space=vmem, size = 0x1000, scoped, tag = 'input window, operand 0']
    #allocation6 [shape = 's32[2]{0}', space=sflag, size = 0x8, scoped, tag = 'scoped memory for tpu_custom_call.1']
    #allocation7 [shape = 's32[2]{0}', space=sflag, size = 0x8, scoped, tag = 'scoped memory for tpu_custom_call.1']
    #allocation8 [shape = 'u8[1024]{0}', space=vmem, size = 0x400, scoped, tag = 'input window, operand 1']
    #allocation9 [shape = 's32[2]{0}', space=sflag, size = 0x8, scoped, tag = 'scoped memory for tpu_custom_call.1']
    #allocation10 [shape = 'u8[1024]{0}', space=vmem, size = 0x400, scoped, tag = 'output window, operand 0']
    %7 = vsyncpa [#allocation6], 0
    %s8 = scalar_lea.sflag [#allocation6], 1
    %9 = vsyncpa %s8, 0
    %10 = vsyncpa [#allocation9], 0
    %s11 = scalar_lea.sflag [#allocation9], 1
    %12 = vsyncpa %s11, 0
    %13 = vsyncpa [#allocation7], 0
    %s14 = scalar_lea.sflag [#allocation7], 1
    %15 = vsyncpa %s14, 0
    loop: start=0, step=1, limit=6
    $region2: #{tpu_custom_call.1} parent=1 // loop_pre_header
      _
    $region3: #{tpu_custom_call.1} parent=1 // loop_header
      %s17 = sphi 0, %s21
      %p18 = scmp.ge.s32.totalorder %s17, 6
      %s24 = sphi 0, %s36
      %s25 = sphi 0, %s32
      %s26 = sphi 0, %s24
      %s27 = sphi 0, %s25
      %s28 = sphi 0, %s26
      %s29 = sphi 0, %s27
      %s41 = sphi 0, %s43
      %s44 = sphi 0, %s41
      %s45 = sphi 0, %s44
      %s61 = sphi 0, %s45
      %s69 = sphi 0, %s71
      %s72 = sphi 0, %s69
      %s73 = sphi 0, %s72
      %s89 = sphi 0, %s73
      %s95 = sphi 0, %s97
      %s98 = sphi 0, %s95
      %s99 = sphi 0, %s98
      %s115 = sphi 0, %s99
    $region4: #{tpu_custom_call.1} parent=1 // loop_header_branch
      %20 = sbr.rel (%p18) target = $region8
    $region5: #{tpu_custom_call.1} parent=1 // loop_body
      %s22 = ssub.s32 %s17, 1
      %s23 = ssub.s32 %s17, 2
      %s30 = sadd.s32 1, %s25
      %p31 = scmp.ge.s32.totalorder %s30, 2
      %s32 = scalar_select %p31, 0, %s30
      %s33 = sadd.s32 1, %s24
      %s34 = scalar_select %p31, %s33, %s24
      %p35 = scmp.ge.s32.totalorder %s34, 2
      %s36 = scalar_select %p35, 0, %s34
      %s37 = ssub.s32 %s24, %s36
      %s38 = ssub.s32 %s25, %s32
      %s39 = sor.u32 %s37, %s38
      %p40 = scmp.eq.s32.totalorder %s39, 0
      %s42 = sadd.s32 %s41, 1
      %s43 = scalar_select %p40, %s41, %s42
      %p46 = pneg %p40
      %p47 = scmp.eq.s32.totalorder %s17, 3
      %p48 = por %p46, %p47
      %p49 = scmp.ne.s32.totalorder %s41, %s44
      %p50 = scmp.eq.s32.totalorder %s17, 0
      %p51 = por %p49, %p50
      %p52 = scmp.ne.s32.totalorder %s41, %s44
      %p53 = scmp.eq.s32.totalorder %s22, 3
      %p54 = por %p52, %p53
      %p55 = scmp.ne.s32.totalorder %s44, %s45
      %p56 = scmp.eq.s32.totalorder %s22, 0
      %p57 = por %p55, %p56
      %p58 = scmp.ne.s32.totalorder %s44, %s45
      %p59 = scmp.eq.s32.totalorder %s23, 3
      %p60 = por %p58, %p59
      %p62 = scmp.ne.s32.totalorder %s45, %s61
      %p63 = scmp.eq.s32.totalorder %s23, 0
      %p64 = por %p62, %p63
      %s65 = ssub.s32 %s24, %s36
      %s66 = ssub.s32 %s25, %s32
      %s67 = sor.u32 %s65, %s66
      %p68 = scmp.eq.s32.totalorder %s67, 0
      %s70 = sadd.s32 %s69, 1
      %s71 = scalar_select %p68, %s69, %s70
      %p74 = pneg %p68
      %p75 = scmp.eq.s32.totalorder %s17, 3
      %p76 = por %p74, %p75
      %p77 = scmp.ne.s32.totalorder %s69, %s72
      %p78 = scmp.eq.s32.totalorder %s17, 0
      %p79 = por %p77, %p78
      %p80 = scmp.ne.s32.totalorder %s69, %s72
      %p81 = scmp.eq.s32.totalorder %s22, 3
      %p82 = por %p80, %p81
      %p83 = scmp.ne.s32.totalorder %s72, %s73
      %p84 = scmp.eq.s32.totalorder %s22, 0
      %p85 = por %p83, %p84
      %p86 = scmp.ne.s32.totalorder %s72, %s73
      %p87 = scmp.eq.s32.totalorder %s23, 3
      %p88 = por %p86, %p87
      %p90 = scmp.ne.s32.totalorder %s73, %s89
      %p91 = scmp.eq.s32.totalorder %s23, 0
      %p92 = por %p90, %p91
      %s93 = ssub.s32 %s24, %s36
      %p94 = scmp.eq.s32.totalorder %s93, 0
      %s96 = sadd.s32 %s95, 1
      %s97 = scalar_select %p94, %s95, %s96
      %p100 = pneg %p94
      %p101 = scmp.eq.s32.totalorder %s17, 3
      %p102 = por %p100, %p101
      %p103 = scmp.ne.s32.totalorder %s95, %s98
      %p104 = scmp.eq.s32.totalorder %s17, 0
      %p105 = por %p103, %p104
      %p106 = scmp.ne.s32.totalorder %s95, %s98
      %p107 = scmp.eq.s32.totalorder %s22, 3
      %p108 = por %p106, %p107
      %p109 = scmp.ne.s32.totalorder %s98, %s99
      %p110 = scmp.eq.s32.totalorder %s22, 0
      %p111 = por %p109, %p110
      %p112 = scmp.ne.s32.totalorder %s98, %s99
      %p113 = scmp.eq.s32.totalorder %s23, 3
      %p114 = por %p112, %p113
      %p116 = scmp.ne.s32.totalorder %s99, %s115
      %p117 = scmp.eq.s32.totalorder %s23, 0
      %p118 = por %p116, %p117
      %p119 = scmp.le.s32.totalorder 1, %s17
      %p120 = scmp.lt.s32.totalorder %s17, 5
      %p121 = pnand %p119, %p120
      %p122 = pneg %p121
      // Predicated region
      $region9: #{tpu_custom_call.1} parent=5 // pred_check
        _
      $region10: #{tpu_custom_call.1} parent=5 // pred_check_branch
        %124 = sbr.rel (%p121) target = $region12
      $region11: #{tpu_custom_call.1} parent=5 // pred_region
        %s125 = ssub.s32 %s17, 1
      $region12: #{tpu_custom_call.1} parent=5 // pred_fallthru
        _
      %p126 = scmp.lt.s32.totalorder %s17, 4
      // Predicated region
      $region13: #{tpu_custom_call.1} parent=5 // pred_check
        %p127 = pneg %p126
      $region14: #{tpu_custom_call.1} parent=5 // pred_check_branch
        %129 = sbr.rel (%p127) target = $region16
      $region15: #{tpu_custom_call.1} parent=5 // pred_region
        // Predicated region
        $region17: #{tpu_custom_call.1} parent=15 // pred_check
          %p130 = pneg %p51
        $region18: #{tpu_custom_call.1} parent=15 // pred_check_branch
          %132 = sbr.rel (%p130) target = $region20
        $region19: #{tpu_custom_call.1} parent=15 // pred_region
          %s133 = sand.u32 %s41, 1
          %s134 = scalar_lea.sflag [#allocation6], %s133
          %s135 = sand.u32 %s41, 1
          %s136 = smul.addr %s135, 4
          %s137 = scalar_lea.vmem [#allocation5], %s136
          %s139 = ssub.s32 64, 64
          %140 = vsyncadd %s134, %s139
          %s141 = smul.addr %s24, 2
          %s142 = sadd.s32 %s25, %s141
          %s143 = smul.addr %s142, 64
          %s144 = scalar_lea.hbm %s0, %s143
          %s146 = sshll.u32 %s137, 4
          %s147 = int_to_ptr.vmem [resolvable:$true] %s146
          %149 = dma.hbm_to_vmem [thread:$0]  %s144, 64, %s147, %s134
        $region20: #{tpu_custom_call.1} parent=15 // pred_fallthru
          _
        // Predicated region
        $region21: #{tpu_custom_call.1} parent=15 // pred_check
          %p150 = pneg %p79
        $region22: #{tpu_custom_call.1} parent=15 // pred_check_branch
          %152 = sbr.rel (%p150) target = $region24
        $region23: #{tpu_custom_call.1} parent=15 // pred_region
          %s153 = sand.u32 %s69, 1
          %s154 = scalar_lea.sflag [#allocation9], %s153
          %s155 = sand.u32 %s69, 1
          %s156 = scalar_lea.vmem [#allocation8], %s155
          %s158 = ssub.s32 16, 16
          %159 = vsyncadd %s154, %s158
          %s160 = smul.addr %s24, 2
          %s161 = sadd.s32 %s25, %s160
          %s162 = smul.addr %s161, 16
          %s163 = scalar_lea.hbm %s1, %s162
          %s165 = sshll.u32 %s156, 4
          %s166 = int_to_ptr.vmem [resolvable:$true] %s165
          %168 = dma.hbm_to_vmem [thread:$0]  %s163, 16, %s166, %s154
        $region24: #{tpu_custom_call.1} parent=15 // pred_fallthru
          _
      $region16: #{tpu_custom_call.1} parent=5 // pred_fallthru
        _
      %p169 = scmp.le.s32.totalorder 1, %s17
      %p170 = scmp.lt.s32.totalorder %s17, 5
      %p171 = pnand %p169, %p170
      %p172 = pneg %p171
      // Predicated region
      $region25: #{tpu_custom_call.1} parent=5 // pred_check
        _
      $region26: #{tpu_custom_call.1} parent=5 // pred_check_branch
        %174 = sbr.rel (%p171) target = $region28
      $region27: #{tpu_custom_call.1} parent=5 // pred_region
        %s175 = ssub.s32 %s17, 1
        %s176 = sand.u32 %s44, 1
        %s177 = scalar_lea.sflag [#allocation6], %s176
        %s178 = sand.u32 %s44, 1
        %s179 = smul.addr %s178, 4
        %s180 = scalar_lea.vmem [#allocation5], %s179
        // Predicated region
        $region29: #{tpu_custom_call.1} parent=27 // pred_check
          %p181 = pneg %p57
        $region30: #{tpu_custom_call.1} parent=27 // pred_check_branch
          %183 = sbr.rel (%p181) target = $region32
        $region31: #{tpu_custom_call.1} parent=27 // pred_region
          %184 = dma.done %s177, 64
        $region32: #{tpu_custom_call.1} parent=27 // pred_fallthru
          _
        %s185 = sand.u32 %s72, 1
        %s186 = scalar_lea.sflag [#allocation9], %s185
        %s187 = sand.u32 %s72, 1
        %s188 = scalar_lea.vmem [#allocation8], %s187
        // Predicated region
        $region33: #{tpu_custom_call.1} parent=27 // pred_check
          %p189 = pneg %p85
        $region34: #{tpu_custom_call.1} parent=27 // pred_check_branch
          %191 = sbr.rel (%p189) target = $region36
        $region35: #{tpu_custom_call.1} parent=27 // pred_region
          %192 = dma.done %s186, 16
        $region36: #{tpu_custom_call.1} parent=27 // pred_fallthru
          _
        %s193 = sand.u32 %s44, 1
        %s194 = scalar_lea.sflag [#allocation6], %s193
        %s195 = sand.u32 %s44, 1
        %s196 = smul.addr %s195, 4
        %s197 = scalar_lea.vmem [#allocation5], %s196
        %p198 = pneg %p57
        %p199 = pneg %p54
        %s200 = sand.u32 %s72, 1
        %s201 = scalar_lea.sflag [#allocation9], %s200
        %s202 = sand.u32 %s72, 1
        %s203 = scalar_lea.vmem [#allocation8], %s202
        %p204 = pneg %p85
        %p205 = pneg %p82
        %p206 = pneg %p111
        %p207 = pneg %p108
        %s208 = sand.u32 %s98, 1
        %s209 = scalar_lea.sflag [#allocation7], %s208
        %s210 = sand.u32 %s98, 1
        %s211 = scalar_lea.vmem [#allocation10], %s210
        %p212 = scmp.eq.s32.totalorder %s27, 0
        // Predicated region
        $region37: #{tpu_custom_call.1} parent=27 // pred_check
          %p213 = pneg %p212
        $region38: #{tpu_custom_call.1} parent=27 // pred_check_branch
          %215 = sbr.rel (%p213) target = $region40
        $region39: #{tpu_custom_call.1} parent=27 // pred_region
          %vm216 = vcmask 3072
          %217 = vst.msk [vmem:[#allocation2] sm:$0xf] %vm216, 0.0
          %218 = vst.msk [vmem:[#allocation3] sm:$0xf] %vm216, 0.0
          %219 = vst.msk [vmem:[#allocation4] sm:$0xf] %vm216, 0.0
        $region40: #{tpu_custom_call.1} parent=27 // pred_fallthru
          _
        %v220 = vld [vmem:[%s180] sm:$0xf]
        %v221 = vld [vmem:[%s188] sm:$0x1]
        %vm222 = vcmask 1043456
        %v223 = vsel %vm222, %v220, -inf
        %v224 = vrot.slane %v223, 4
        %v225 = vmax.f32 %v223, %v224
        %v226 = vrot.slane %v225, 2
        %v227 = vmax.f32 %v225, %v226
        %v228 = vrot.slane %v227, 1
        %v229 = vmax.f32 %v227, %v228
        %v230 = vsub.f32 %v220, %v229
        %v231 = vmul.f32 %v230, 1.442695
        %v232 = vpow.pop %v231
        %v233 = vsel %vm222, %v232, 0.0
        %v234 = vrot.slane %v233, 4
        %v235 = vadd.f32 %v233, %v234
        %v236 = vrot.slane %v235, 2
        %v237 = vadd.f32 %v235, %v236
        %v238 = vrot.slane %v237, 1
        %v239 = vadd.f32 %v237, %v238
        %v240 = vrcp.pop %v239
        %v241 = vmul.f32 %v239, %v240
        %v242 = vsub.f32 2.0, %v241
        %v243 = vmul.f32 %v240, %v242
        %v244 = vmul.f32 %v232, %v243
        %v245 = vlaneseq
        %v246 = vshrl.u32 %v245, 7
        %v247 = vlaneseq
        %v248 = vshrl.u32 %v247, 7
        %v249 = vsub.s32 0, %v248
        %v250 = vrot.slane %v221, %v249
        %vm251 = vcmp.eq.s32.totalorder %v246, %v250
        %v252 = vld [vmem:[#allocation2] sm:$0xf]
        %v253 = vsel %vm251, %v244, 0.0
        %v254 = vsel %vm222, %v253, 0.0
        %255 = vadd.xlane.f32.xlu0 %v254
        %v256 = vpop.xlane.xlu0 %255
        %v257 = vadd.f32 %v252, %v256
        %vm258 = vcmask 3072
        %259 = vst.msk [vmem:[#allocation2] sm:$0xf] %vm258, %v257
        %v260 = vld [vmem:[#allocation3] sm:$0xf]
        %v261 = vsel %vm222, %v244, 0.0
        %262 = vadd.xlane.f32.xlu0 %v261
        %v263 = vpop.xlane.xlu0 %262
        %v264 = vadd.f32 %v260, %v263
        %265 = vst.msk [vmem:[#allocation3] sm:$0xf] %vm258, %v264
        %v266 = vld [vmem:[#allocation4] sm:$0xf]
        %v267 = vsel %vm251, 1.0, 0.0
        %v268 = vsel %vm222, %v267, 0.0
        %269 = vadd.xlane.f32.xlu0 %v268
        %v270 = vpop.xlane.xlu0 %269
        %v271 = vadd.f32 %v266, %v270
        %272 = vst.msk [vmem:[#allocation4] sm:$0xf] %vm258, %v271
        %p273 = scmp.eq.s32.totalorder %s27, 1
        // Predicated region
        $region41: #{tpu_custom_call.1} parent=27 // pred_check
          %p274 = pneg %p273
        $region42: #{tpu_custom_call.1} parent=27 // pred_check_branch
          %276 = sbr.rel (%p274) target = $region44
        $region43: #{tpu_custom_call.1} parent=27 // pred_region
          %v277 = vld [vmem:[#allocation2] sm:$0xf]
          %v278 = vld [vmem:[#allocation3] sm:$0xf]
          %v279 = vsub.f32 %v278, %v277
          %v280 = vmul.f32 %v279, 1.3
          %v281 = vld [vmem:[#allocation4] sm:$0xf]
          %v282 = vsub.f32 %v281, %v277
          %v283 = vmul.f32 %v282, 0.7
          %v284 = vmul.f32 %v277, 2.0
          %v285 = vadd.f32 %v284, %v280
          %v286 = vadd.f32 %v285, %v283
          %v287 = vadd.f32 %v286, 1e-05
          %v288 = vrcp.pop %v287
          %v289 = vmul.f32 %v284, %v288
          %v290 = vsel %vm258, %v289, 0.0
          %v291 = vrot.slane %v290, 4
          %v292 = vadd.f32 %v290, %v291
          %v293 = vrot.slane %v292, 2
          %v294 = vadd.f32 %v292, %v293
          %v295 = vrot.slane %v294, 1
          %v296 = vadd.f32 %v294, %v295
          %v297 = vsub.f32 %v296, %v289
          %299 = vset.pattern.permute.xlu0 0
          %300 = vperm.xlu0 %299, %v297
          %v301 = vpop.permute.xlu0 %300
          %303 = vst [vmem:[%s211] sm:$0x1] %v301
        $region44: #{tpu_custom_call.1} parent=27 // pred_fallthru
          _
        %s304 = sand.u32 %s98, 1
        %s305 = scalar_lea.sflag [#allocation7], %s304
        %s306 = sand.u32 %s98, 1
        %s307 = scalar_lea.vmem [#allocation10], %s306
        // Predicated region
        $region45: #{tpu_custom_call.1} parent=27 // pred_check
          %p308 = pneg %p108
        $region46: #{tpu_custom_call.1} parent=27 // pred_check_branch
          %310 = sbr.rel (%p308) target = $region48
        $region47: #{tpu_custom_call.1} parent=27 // pred_region
          %s312 = ssub.s32 16, 16
          %313 = vsyncadd %s305, %s312
          %s314 = smul.addr %s26, 16
          %s315 = scalar_lea.hbm %s2, %s314
          %s317 = sshll.u32 %s307, 4
          %s318 = int_to_ptr.vmem [resolvable:$true] %s317
          %320 = dma.vmem_to_hbm [thread:$0]  %s318, 16, %s315, %s305
        $region48: #{tpu_custom_call.1} parent=27 // pred_fallthru
          _
      $region28: #{tpu_custom_call.1} parent=5 // pred_fallthru
        _
      %p321 = scmp.le.s32.totalorder 2, %s17
      // Predicated region
      $region49: #{tpu_custom_call.1} parent=5 // pred_check
        %p322 = pneg %p321
      $region50: #{tpu_custom_call.1} parent=5 // pred_check_branch
        %324 = sbr.rel (%p322) target = $region52
      $region51: #{tpu_custom_call.1} parent=5 // pred_region
        %s325 = ssub.s32 %s17, 2
        // Predicated region
        $region53: #{tpu_custom_call.1} parent=51 // pred_check
          %p326 = pneg %p114
        $region54: #{tpu_custom_call.1} parent=51 // pred_check_branch
          %328 = sbr.rel (%p326) target = $region56
        $region55: #{tpu_custom_call.1} parent=51 // pred_region
          %s329 = sand.u32 %s99, 1
          %s330 = scalar_lea.sflag [#allocation7], %s329
          %s331 = sand.u32 %s99, 1
          %s332 = scalar_lea.vmem [#allocation10], %s331
          %333 = dma.done %s330, 16
        $region56: #{tpu_custom_call.1} parent=51 // pred_fallthru
          _
      $region52: #{tpu_custom_call.1} parent=5 // pred_fallthru
        _
    $region6: #{tpu_custom_call.1} parent=1 // loop_footer
      %s21 = sadd.s32 1, %s17
    $region7: #{tpu_custom_call.1} parent=1 // loop_footer_branch
      %16 = sbr.rel target = $region3
    $region8: #{tpu_custom_call.1} parent=1 // loop_exit
      _
    %334 = vsyncpa [#allocation6], 1
    %s335 = scalar_lea.sflag [#allocation6], 1
    %336 = vsyncpa %s335, 1
    %337 = vsyncpa [#allocation9], 1
    %s338 = scalar_lea.sflag [#allocation9], 1
    %339 = vsyncpa %s338, 1
    %340 = vsyncpa [#allocation7], 1
    %s341 = scalar_lea.sflag [#allocation7], 1
    %342 = vsyncpa %s341, 1

</llo_original>
